<compile_context>
chip_gen: v5e
topology: v5e:2x2
jax: 0.10.0
libtpu: 0.0.40
codegen_flags: <defaults>
</compile_context>

<pallas_src>
import numpy as np
import jax
import jax.numpy as jnp
from jax.experimental import pallas as pl
from jax.experimental.pallas import tpu as pltpu

# Synthetic (small) SMPL dimensions -- deterministic synthetic model, not a
# checkpoint load (the PyTorch module loads SMPL_*.pth from disk).
V = 128             # vertices (real SMPL = 6890)
K = 24              # kinematic joints
K_PAD = 32          # joints padded so 4*K_PAD == 128 lanes / clean k-dim
NB = 10             # shape betas
NP = (K - 1) * 9    # pose-blend features = 207
NBP = NB + NP + 1   # blend contraction: betas | pose_feat | const-1 = 218
NBP_PAD = 224       # padded to a multiple of 8 sublanes (zero rows are free)
NJ_EXTRA = 71       # "joints54_17" regressor size (54 + 17)
NJ_PAD = 128        # extra joints padded to a full 128-lane vreg

PARENTS = np.array([-1, 0, 0, 0, 1, 2, 3, 4, 5, 6, 7, 8,
                    9, 9, 9, 12, 13, 14, 16, 17, 18, 19, 20, 21], dtype=np.int32)


def _padded_rows(b):
    """Pad the batch to >=8 sublane rows (and to a 128 multiple past 128)."""
    rows = max(8, ((b + 7) // 8) * 8)
    if rows > 128:
        rows = ((rows + 127) // 128) * 128
    return rows


# ---------------------------------------------------------------------------
# Fused Pallas kernel: blend shapes + linear-blend skinning + extra joints
# ---------------------------------------------------------------------------
def _smpl_fused_kernel(bp_ref, m_ref, dirs_ref, wt_ref, jr_ref,
                       verts_ref, j71_ref):
    """Per-batch-tile fused SMPL vertex math.

    bp_ref   : (bm, NBP_PAD)     rows = [betas | pose_feat | 1 | 0-pad]
    m_ref    : (12, bm, K_PAD)   m[r*4+g, b, k] = A[b,k][r,g] (g==3 -> trans)
    dirs_ref : (NBP_PAD, 3V)     [shapedirs | posedirs | v_template | 0-pad]
    wt_ref   : (K_PAD, V)        skinning weights W^T (rows K..K_PAD-1 zero)
    jr_ref   : (V, NJ_PAD)       joints54_17 regressor^T, zero-padded lanes
    verts_ref: (3, bm, V)        coordinate-major posed vertices (f32)
    j71_ref  : (3, bm, NJ_PAD)   coordinate-major extra joints (f32, padded)
    """
    f32 = jnp.float32
    # Shape+pose blend for all 3 coordinates at once (coordinate-major lanes):
    # vp[b, c*V + v] = posed rest-vertex coordinate c of vertex v of body b.
    vp = jnp.dot(bp_ref[...], dirs_ref[...], preferred_element_type=f32)   # (bm,3V)
    wt = wt_ref[...]            # resident skinning weights
    jr = jr_ref[...]            # resident extra-joint regressor
    for r in range(3):          # static unroll over the 3 output coordinates
        # Per-vertex affine row r: translation field + sum_c R[r,c]-field * vp_c.
        acc = jnp.dot(m_ref[4 * r + 3], wt, preferred_element_type=f32)    # (bm,V)
        for c in range(3):
            acc += (jnp.dot(m_ref[4 * r + c], wt, preferred_element_type=f32)
                    * vp[:, c * V:(c + 1) * V])
        verts_ref[r] = acc
        # NOTE: lanes NJ_EXTRA..NJ_PAD-1 of jr are structural zeros and must
        # remain zero (the wrapper slices them away).
        j71_ref[r] = jnp.dot(acc.astype(jr.dtype), jr, preferred_element_type=f32)


def smpl_fused_pallas(bp, m12, params):
    """pallas_call with a batch grid; weight BlockSpecs are batch-invariant."""
    BP = bp.shape[0]
    bm = min(BP, 128)
    assert BP % bm == 0
    nsteps = BP // bm
    f32 = jnp.float32
    dirs, wt, jr = params["dirs_ext"], params["wt"], params["jr71_pad"]

    nbytes = lambda x: x.size * x.dtype.itemsize
    flops = (2 * BP * NBP_PAD * 3 * V        # shape/pose blend matmul
             + 2 * 12 * BP * K_PAD * V       # 12 skinning-coefficient mixes
             + 2 * 3 * BP * V * NJ_PAD       # extra-joint regression
             + 9 * BP * V)                   # skinning combine FMAs
    bytes_accessed = (nbytes(bp) + nbytes(m12) + nbytes(dirs) + nbytes(wt)
                      + nbytes(jr) + 4 * (3 * BP * V + 3 * BP * NJ_PAD))

    return pl.pallas_call(
        _smpl_fused_kernel,
        out_shape=(jax.ShapeDtypeStruct((3, BP, V), f32),
                   jax.ShapeDtypeStruct((3, BP, NJ_PAD), f32)),
        grid_spec=pltpu.PrefetchScalarGridSpec(
            num_scalar_prefetch=0,
            grid=(nsteps,),
            in_specs=[
                pl.BlockSpec((bm, NBP_PAD), lambda i: (i, 0)),
                pl.BlockSpec((12, bm, K_PAD), lambda i: (0, i, 0)),
                # Weights: index_map ignores the batch axis -> resident blocks.
                pl.BlockSpec((NBP_PAD, 3 * V), lambda i: (0, 0)),
                pl.BlockSpec((K_PAD, V), lambda i: (0, 0)),
                pl.BlockSpec((V, NJ_PAD), lambda i: (0, 0)),
            ],
            out_specs=(
                pl.BlockSpec((3, bm, V), lambda i: (0, i, 0)),
                pl.BlockSpec((3, bm, NJ_PAD), lambda i: (0, i, 0)),
            )),
        compiler_params=pltpu.CompilerParams(
            dimension_semantics=("parallel",)),
        cost_estimate=pl.CostEstimate(flops=flops, transcendentals=0,
                                      bytes_accessed=bytes_accessed),
    )(bp, m12, dirs, wt, jr)


# ---------------------------------------------------------------------------
# Plain-JAX glue (all fused under one jax.jit): Rodrigues + forward kinematics
# ---------------------------------------------------------------------------
def batch_rodrigues(rvecs, eps=1e-8):
    """(B, K, 3) axis-angle -> (B, K, 3, 3) rotation matrices.

    NOTE: eps is added inside the squared norm (slight bias for near-zero
    rotations vs. the usual eps-on-angle handling); negligible numerically.
    """
    angle = jnp.sqrt(jnp.sum(rvecs * rvecs, axis=-1, keepdims=True) + eps)
    axis = rvecs / angle
    cos = jnp.cos(angle)[..., None]
    sin = jnp.sin(angle)[..., None]
    rx, ry, rz = axis[..., 0], axis[..., 1], axis[..., 2]
    zeros = jnp.zeros_like(rx)
    kmat = jnp.stack([zeros, -rz, ry,
                      rz, zeros, -rx,
                      -ry, rx, zeros], axis=-1).reshape(rvecs.shape[:-1] + (3, 3))
    outer = axis[..., :, None] * axis[..., None, :]
    ident = jnp.eye(3, dtype=rvecs.dtype)
    return cos * ident + (1.0 - cos) * outer + sin * kmat


def _rigid_transform(rot, joints, parents):
    """rot (B,K,3,3), joints (B,K,3) -> A_rot (B,K,3,3), A_trans (B,K,3).

    Broadcast/sum elementwise ops (no tiny 4x4 dot HLOs) so XLA fuses the
    23-step kinematic chain instead of issuing 23 small matmuls.
    """
    g_rot = [rot[:, 0]]
    g_tr = [joints[:, 0]]
    for i in range(1, K):
        p = int(parents[i])
        rel = joints[:, i] - joints[:, p]
        g_rot.append(jnp.sum(g_rot[p][:, :, :, None] * rot[:, i][:, None, :, :],
                             axis=2))                                      # Gp @ Ri
        g_tr.append(g_tr[p] + jnp.sum(g_rot[p] * rel[:, None, :], axis=-1))
    a_rot = jnp.stack(g_rot, axis=1)                                       # (B,K,3,3)
    g_tr = jnp.stack(g_tr, axis=1)                                         # (B,K,3)
    a_trans = g_tr - jnp.sum(a_rot * joints[:, :, None, :], axis=-1)       # (B,K,3)
    return a_rot, a_trans


def smpl_forward(pose, betas, params):
    B = pose.shape[0]
    BP = _padded_rows(B)
    cdt = params["dirs_ext"].dtype
    f32 = jnp.float32

    rot = batch_rodrigues(pose.reshape(B, K, 3))                           # (B,K,3,3)
    pose_feat = (rot[:, 1:] - jnp.eye(3, dtype=f32)).reshape(B, NP)        # (B,207)

    # Rest-pose joints regressed algebraically from betas (no (V,K) contraction).
    joints = params["j_template"][None] + jnp.einsum(
        "bn,nkc->bkc", betas, params["j_shapedirs"], precision="highest")  # (B,K,3)

    a_rot, a_trans = _rigid_transform(rot, joints, PARENTS)

    # Pack skinning coefficients: m12[r*4+g, b, k] = A[b,k][r,g] (g==3 -> trans).
    mrot = jnp.transpose(a_rot, (2, 3, 0, 1))                              # (3,3,B,K)
    mtr = jnp.transpose(a_trans, (2, 0, 1))[:, None]                       # (3,1,B,K)
    m12 = jnp.concatenate([mrot, mtr], axis=1).reshape(12, B, K)
    m12p = jnp.zeros((12, BP, K_PAD), f32).at[:, :B, :K].set(m12)

    # [betas | pose_feat | 1 | 0-pad], one row per body (no 3x replication).
    bp = jnp.zeros((BP, NBP_PAD), f32)
    bp = (bp.at[:B, :NB].set(betas)
            .at[:B, NB:NB + NP].set(pose_feat)
            .at[:B, NB + NP].set(1.0))

    verts_cm, j71_cm = smpl_fused_pallas(bp.astype(cdt), m12p.astype(cdt), params)

    # TODO(synk): the channel-last (B,V,3)/(B,71,3) relayout below only exists
    # to match the PyTorch module's return convention; TPU consumers should use
    # the lane-dense coordinate-major kernel outputs directly.
    verts = jnp.transpose(verts_cm, (1, 2, 0))[:B]                         # (B,V,3)
    joints71 = jnp.transpose(j71_cm[:, :, :NJ_EXTRA], (1, 2, 0))[:B]       # (B,71,3)
    return verts, joints71


_smpl_forward_jit = jax.jit(smpl_forward)


# ---------------------------------------------------------------------------
# Synthetic deterministic SMPL parameters (+ packed forms for the kernel)
# ---------------------------------------------------------------------------
def init_smpl_raw(seed=0):
    key = jax.random.PRNGKey(seed)
    ks = jax.random.split(key, 6)
    return {
        "v_template": jax.random.normal(ks[0], (V, 3), jnp.float32) * 0.3,
        "shapedirs": jax.random.normal(ks[1], (V, 3, NB), jnp.float32) * 0.03,
        "posedirs": jax.random.normal(ks[2], (V, 3, NP), jnp.float32) * 0.01,
        "j_regressor": jax.nn.softmax(
            2.0 * jax.random.normal(ks[3], (K, V), jnp.float32), axis=-1),
        "lbs_weights": jax.nn.softmax(
            2.0 * jax.random.normal(ks[4], (V, K), jnp.float32), axis=-1),
        "j_regressor_extra": jax.nn.softmax(
            2.0 * jax.random.normal(ks[5], (NJ_EXTRA, V), jnp.float32), axis=-1),
    }


def pack_smpl_params(raw, param_dtype=jnp.bfloat16):
    f32 = jnp.float32
    # Blend matrix rows = [shapedirs | posedirs | v_template | 0-pad], cols c*V+v.
    dirs_sh = jnp.transpose(raw["shapedirs"], (2, 1, 0)).reshape(NB, 3 * V)
    dirs_ps = jnp.transpose(raw["posedirs"], (2, 1, 0)).reshape(NP, 3 * V)
    vt_row = jnp.transpose(raw["v_template"], (1, 0)).reshape(3 * V)
    dirs_ext = (jnp.zeros((NBP_PAD, 3 * V), f32)
                .at[:NB].set(dirs_sh)
                .at[NB:NB + NP].set(dirs_ps)
                .at[NB + NP].set(vt_row))

    # Algebraic joint regression: J = j_template + betas @ j_shapedirs.
    j_template = jnp.einsum("kv,vc->kc", raw["j_regressor"], raw["v_template"],
                            precision="highest")                           # (K,3)
    j_shapedirs = jnp.einsum("kv,vcn->nkc", raw["j_regressor"],
                             raw["shapedirs"], precision="highest")        # (NB,K,3)

    # Single resident W^T, zero-padded to K_PAD rows (no block-diagonal w4).
    wt = jnp.zeros((K_PAD, V), f32).at[:K].set(raw["lbs_weights"].T)

    # joints54_17 regressor, transposed + zero-padded to 128 lanes.
    jr71_pad = jnp.zeros((V, NJ_PAD), f32).at[:, :NJ_EXTRA].set(
        raw["j_regressor_extra"].T)

    return {"dirs_ext": dirs_ext.astype(param_dtype),
            "wt": wt.astype(param_dtype),
            "jr71_pad": jr71_pad.astype(param_dtype),
            "j_template": j_template,           # stays f32 (glue only)
            "j_shapedirs": j_shapedirs}         # stays f32 (glue only)


class SMPLRPallas:
    """Mirror of the PyTorch SMPLR module (returns verts, joints[:, :54])."""

    def __init__(self, use_gender=False, seed=0, param_dtype=jnp.bfloat16):
        genders = ["n"] + (["f", "m"] if use_gender else [])
        self.raw = {g: init_smpl_raw(seed + i) for i, g in enumerate(genders)}
        self.smpls = {g: pack_smpl_params(r, param_dtype)
                      for g, r in self.raw.items()}

    def __call__(self, pose, betas, gender="n"):
        pose = jnp.asarray(pose, jnp.float32)
        betas = jnp.asarray(betas, jnp.float32)
        if pose.ndim == 1:
            pose, betas = pose[None], betas[None]
        verts, joints71 = _smpl_forward_jit(pose, betas, self.smpls[gender])
        # TODO(synk): PyTorch SMPLR returns .numpy(); we return device arrays.
        return verts, joints71[:, :54]


# ---------------------------------------------------------------------------
# Pure-JAX reference of the original SMPL math (high-precision self-check)
# ---------------------------------------------------------------------------
def smpl_reference(pose, betas, raw):
    hi = "highest"
    B = pose.shape[0]
    rot = batch_rodrigues(pose.reshape(B, K, 3))
    pose_feat = (rot[:, 1:] - jnp.eye(3, dtype=jnp.float32)).reshape(B, NP)
    v_shaped = raw["v_template"][None] + jnp.einsum("bn,vcn->bvc", betas,
                                                    raw["shapedirs"], precision=hi)
    joints = jnp.einsum("kv,bvc->bkc", raw["j_regressor"], v_shaped, precision=hi)
    v_posed = v_shaped + jnp.einsum("bm,vcm->bvc", pose_feat,
                                    raw["posedirs"], precision=hi)

    rel = joints.at[:, 1:].add(-joints[:, PARENTS[1:]])
    tm34 = jnp.concatenate([rot, rel[..., None]], axis=-1)                 # (B,K,3,4)
    bottom = jnp.broadcast_to(jnp.array([0., 0., 0., 1.], jnp.float32),
                              (B, K, 1, 4))
    tm = jnp.concatenate([tm34, bottom], axis=-2)                          # (B,K,4,4)
    chain = [tm[:, 0]]
    for i in range(1, K):
        chain.append(jnp.einsum("bij,bjk->bik", chain[int(PARENTS[i])],
                                tm[:, i], precision=hi))
    G = jnp.stack(chain, axis=1)                                           # (B,K,4,4)
    jh = jnp.concatenate([joints, jnp.zeros((B, K, 1), jnp.float32)], axis=-1)
    corr = jnp.einsum("bkij,bkj->bki", G, jh, precision=hi)
    A = G - jnp.concatenate([jnp.zeros((B, K, 4, 3), jnp.float32),
                             corr[..., None]], axis=-1)

    T = jnp.einsum("vk,bkij->bvij", raw["lbs_weights"], A, precision=hi)   # (B,V,4,4)
    vh = jnp.concatenate([v_posed, jnp.ones((B, V, 1), jnp.float32)], axis=-1)
    verts = jnp.einsum("bvij,bvj->bvi", T, vh, precision=hi)[..., :3]
    joints71 = jnp.einsum("jv,bvc->bjc", raw["j_regressor_extra"], verts,
                          precision=hi)
    return verts, joints71


if __name__ == "__main__":
    key = jax.random.PRNGKey(0)
    kp, kb = jax.random.split(key)
    B = 2
    pose = 0.2 * jax.random.normal(kp, (B, 72), jnp.float32)
    betas = 0.5 * jax.random.normal(kb, (B, NB), jnp.float32)

    model_bf16 = SMPLRPallas()                              # production path
    model_f32 = SMPLRPallas(param_dtype=jnp.float32)        # verification path

    verts, joints54 = model_bf16(pose, betas)
    verts = jax.block_until_ready(verts)
    joints54 = jax.block_until_ready(joints54)
    assert verts.shape == (B, V, 3)
    assert joints54.shape == (B, 54, 3)
    assert np.isfinite(np.asarray(verts)).all()
    assert np.isfinite(np.asarray(joints54)).all()

    verts_ref, joints71_ref = smpl_reference(pose, betas, model_bf16.raw["n"])
    verts_ref = np.asarray(verts_ref)
    joints54_ref = np.asarray(joints71_ref[:, :54])

    # bf16 MXU inputs bound the achievable accuracy of the production path.
    np.testing.assert_allclose(np.asarray(verts), verts_ref, rtol=3e-2, atol=3e-2)
    np.testing.assert_allclose(np.asarray(joints54), joints54_ref,
                               rtol=3e-2, atol=3e-2)

    # f32-weight path: tightened check (observed error is ~1e-5; the bound is
    # kept loose enough only to tolerate MXU f32 multi-pass rounding while
    # still catching any packing/indexing/algebra bug, which would be O(0.1+)).
    verts32, joints54_32 = model_f32(pose, betas)
    verts32 = jax.block_until_ready(verts32)
    np.testing.assert_allclose(np.asarray(verts32), verts_ref, rtol=1e-2, atol=1e-2)
    np.testing.assert_allclose(np.asarray(joints54_32), joints54_ref,
                               rtol=1e-2, atol=1e-2)

    print("KERNEL_OK")
</pallas_src>

<mosaic_0001>
module attributes {stable_mosaic.version = 11 : i64} {
  func.func @_smpl_fused_kernel(%arg0: i32, %arg1: memref<8x224xbf16, #tpu.memory_space<vmem>>, %arg2: memref<12x8x32xbf16, #tpu.memory_space<vmem>>, %arg3: memref<224x384xbf16, #tpu.memory_space<vmem>>, %arg4: memref<32x128xbf16, #tpu.memory_space<vmem>>, %arg5: memref<128x128xbf16, #tpu.memory_space<vmem>>, %arg6: memref<3x8x128xf32, #tpu.memory_space<vmem>>, %arg7: memref<3x8x128xf32, #tpu.memory_space<vmem>>) attributes {dimension_semantics = [#tpu.dimension_semantics<parallel>], iteration_bounds = array<i64: 1>, scalar_prefetch = 0 : i64, scratch_operands = 0 : i64, tpu.core_type = #tpu.core_type<tc>, window_params = [{transform_indices = @transform_0, window_bounds = array<i64: 8, 224>}, {transform_indices = @transform_1, window_bounds = array<i64: 12, 8, 32>}, {pipeline_mode = #tpu.pipeline_mode<synchronous>, transform_indices = @transform_2, window_bounds = array<i64: 224, 384>}, {pipeline_mode = #tpu.pipeline_mode<synchronous>, transform_indices = @transform_3, window_bounds = array<i64: 32, 128>}, {pipeline_mode = #tpu.pipeline_mode<synchronous>, transform_indices = @transform_4, window_bounds = array<i64: 128, 128>}, {transform_indices = @transform_5, window_bounds = array<i64: 3, 8, 128>}, {transform_indices = @transform_6, window_bounds = array<i64: 3, 8, 128>}]} {
    %c0 = arith.constant 0 : index
    %c0_0 = arith.constant 0 : index
    %0 = vector.load %arg1[%c0, %c0_0] : memref<8x224xbf16, #tpu.memory_space<vmem>>, vector<8x224xbf16>
    %c0_1 = arith.constant 0 : index
    %c0_2 = arith.constant 0 : index
    %1 = vector.load %arg3[%c0_1, %c0_2] : memref<224x384xbf16, #tpu.memory_space<vmem>>, vector<224x384xbf16>
    %cst = arith.constant dense<0.000000e+00> : vector<8x384xf32>
    %2 = tpu.matmul %0, %1, %cst {dimension_numbers = #tpu.dot_dimension_numbers<[1], [0], [0], [1], [0, 0, 1, 1], [], []>} : vector<8x224xbf16>, vector<224x384xbf16>, vector<8x384xf32> -> vector<8x384xf32>
    %c0_3 = arith.constant 0 : index
    %c0_4 = arith.constant 0 : index
    %3 = vector.load %arg4[%c0_3, %c0_4] : memref<32x128xbf16, #tpu.memory_space<vmem>>, vector<32x128xbf16>
    %c0_5 = arith.constant 0 : index
    %c0_6 = arith.constant 0 : index
    %4 = vector.load %arg5[%c0_5, %c0_6] : memref<128x128xbf16, #tpu.memory_space<vmem>>, vector<128x128xbf16>
    %c3 = arith.constant 3 : index
    %c0_7 = arith.constant 0 : index
    %c0_8 = arith.constant 0 : index
    %5 = vector.load %arg2[%c3, %c0_7, %c0_8] : memref<12x8x32xbf16, #tpu.memory_space<vmem>>, vector<1x8x32xbf16>
    %6 = vector.shape_cast %5 : vector<1x8x32xbf16> to vector<8x32xbf16>
    %cst_9 = arith.constant dense<0.000000e+00> : vector<8x128xf32>
    %7 = tpu.matmul %6, %3, %cst_9 {dimension_numbers = #tpu.dot_dimension_numbers<[1], [0], [0], [1], [0, 0, 1, 1], [], []>} : vector<8x32xbf16>, vector<32x128xbf16>, vector<8x128xf32> -> vector<8x128xf32>
    %c0_10 = arith.constant 0 : index
    %c0_11 = arith.constant 0 : index
    %c0_12 = arith.constant 0 : index
    %8 = vector.load %arg2[%c0_10, %c0_11, %c0_12] : memref<12x8x32xbf16, #tpu.memory_space<vmem>>, vector<1x8x32xbf16>
    %9 = vector.shape_cast %8 : vector<1x8x32xbf16> to vector<8x32xbf16>
    %cst_13 = arith.constant dense<0.000000e+00> : vector<8x128xf32>
    %10 = tpu.matmul %9, %3, %cst_13 {dimension_numbers = #tpu.dot_dimension_numbers<[1], [0], [0], [1], [0, 0, 1, 1], [], []>} : vector<8x32xbf16>, vector<32x128xbf16>, vector<8x128xf32> -> vector<8x128xf32>
    %11 = vector.extract_strided_slice %2 {offsets = [0, 0], sizes = [8, 128], strides = [1, 1]} : vector<8x384xf32> to vector<8x128xf32>
    %12 = arith.mulf %10, %11 : vector<8x128xf32>
    %13 = arith.addf %7, %12 : vector<8x128xf32>
    %c1 = arith.constant 1 : index
    %c0_14 = arith.constant 0 : index
    %c0_15 = arith.constant 0 : index
    %14 = vector.load %arg2[%c1, %c0_14, %c0_15] : memref<12x8x32xbf16, #tpu.memory_space<vmem>>, vector<1x8x32xbf16>
    %15 = vector.shape_cast %14 : vector<1x8x32xbf16> to vector<8x32xbf16>
    %cst_16 = arith.constant dense<0.000000e+00> : vector<8x128xf32>
    %16 = tpu.matmul %15, %3, %cst_16 {dimension_numbers = #tpu.dot_dimension_numbers<[1], [0], [0], [1], [0, 0, 1, 1], [], []>} : vector<8x32xbf16>, vector<32x128xbf16>, vector<8x128xf32> -> vector<8x128xf32>
    %17 = vector.extract_strided_slice %2 {offsets = [0, 128], sizes = [8, 128], strides = [1, 1]} : vector<8x384xf32> to vector<8x128xf32>
    %18 = arith.mulf %16, %17 : vector<8x128xf32>
    %19 = arith.addf %13, %18 : vector<8x128xf32>
    %c2 = arith.constant 2 : index
    %c0_17 = arith.constant 0 : index
    %c0_18 = arith.constant 0 : index
    %20 = vector.load %arg2[%c2, %c0_17, %c0_18] : memref<12x8x32xbf16, #tpu.memory_space<vmem>>, vector<1x8x32xbf16>
    %21 = vector.shape_cast %20 : vector<1x8x32xbf16> to vector<8x32xbf16>
    %cst_19 = arith.constant dense<0.000000e+00> : vector<8x128xf32>
    %22 = tpu.matmul %21, %3, %cst_19 {dimension_numbers = #tpu.dot_dimension_numbers<[1], [0], [0], [1], [0, 0, 1, 1], [], []>} : vector<8x32xbf16>, vector<32x128xbf16>, vector<8x128xf32> -> vector<8x128xf32>
    %23 = vector.extract_strided_slice %2 {offsets = [0, 256], sizes = [8, 128], strides = [1, 1]} : vector<8x384xf32> to vector<8x128xf32>
    %24 = arith.mulf %22, %23 : vector<8x128xf32>
    %25 = arith.addf %19, %24 : vector<8x128xf32>
    %c0_20 = arith.constant 0 : index
    %c0_21 = arith.constant 0 : index
    %c0_22 = arith.constant 0 : index
    %26 = vector.load %arg6[%c0_20, %c0_21, %c0_22] : memref<3x8x128xf32, #tpu.memory_space<vmem>>, vector<1x8x128xf32>
    %27 = vector.shape_cast %26 : vector<1x8x128xf32> to vector<8x128xf32>
    %28 = vector.shape_cast %25 : vector<8x128xf32> to vector<1x8x128xf32>
    tpu.vector_store %arg6[%c0_20, %c0_21, %c0_22], %28 {strides = array<i32>} : memref<3x8x128xf32, #tpu.memory_space<vmem>>, vector<1x8x128xf32>,
    %29 = arith.truncf %25 : vector<8x128xf32> to vector<8x128xbf16>
    %cst_23 = arith.constant dense<0.000000e+00> : vector<8x128xf32>
    %30 = tpu.matmul %29, %4, %cst_23 {dimension_numbers = #tpu.dot_dimension_numbers<[1], [0], [0], [1], [0, 0, 1, 1], [], []>} : vector<8x128xbf16>, vector<128x128xbf16>, vector<8x128xf32> -> vector<8x128xf32>
    %c0_24 = arith.constant 0 : index
    %c0_25 = arith.constant 0 : index
    %c0_26 = arith.constant 0 : index
    %31 = vector.load %arg7[%c0_24, %c0_25, %c0_26] : memref<3x8x128xf32, #tpu.memory_space<vmem>>, vector<1x8x128xf32>
    %32 = vector.shape_cast %31 : vector<1x8x128xf32> to vector<8x128xf32>
    %33 = vector.shape_cast %30 : vector<8x128xf32> to vector<1x8x128xf32>
    tpu.vector_store %arg7[%c0_24, %c0_25, %c0_26], %33 {strides = array<i32>} : memref<3x8x128xf32, #tpu.memory_space<vmem>>, vector<1x8x128xf32>,
    %c7 = arith.constant 7 : index
    %c0_27 = arith.constant 0 : index
    %c0_28 = arith.constant 0 : index
    %34 = vector.load %arg2[%c7, %c0_27, %c0_28] : memref<12x8x32xbf16, #tpu.memory_space<vmem>>, vector<1x8x32xbf16>
    %35 = vector.shape_cast %34 : vector<1x8x32xbf16> to vector<8x32xbf16>
    %cst_29 = arith.constant dense<0.000000e+00> : vector<8x128xf32>
    %36 = tpu.matmul %35, %3, %cst_29 {dimension_numbers = #tpu.dot_dimension_numbers<[1], [0], [0], [1], [0, 0, 1, 1], [], []>} : vector<8x32xbf16>, vector<32x128xbf16>, vector<8x128xf32> -> vector<8x128xf32>
    %c4 = arith.constant 4 : index
    %c0_30 = arith.constant 0 : index
    %c0_31 = arith.constant 0 : index
    %37 = vector.load %arg2[%c4, %c0_30, %c0_31] : memref<12x8x32xbf16, #tpu.memory_space<vmem>>, vector<1x8x32xbf16>
    %38 = vector.shape_cast %37 : vector<1x8x32xbf16> to vector<8x32xbf16>
    %cst_32 = arith.constant dense<0.000000e+00> : vector<8x128xf32>
    %39 = tpu.matmul %38, %3, %cst_32 {dimension_numbers = #tpu.dot_dimension_numbers<[1], [0], [0], [1], [0, 0, 1, 1], [], []>} : vector<8x32xbf16>, vector<32x128xbf16>, vector<8x128xf32> -> vector<8x128xf32>
    %40 = vector.extract_strided_slice %2 {offsets = [0, 0], sizes = [8, 128], strides = [1, 1]} : vector<8x384xf32> to vector<8x128xf32>
    %41 = arith.mulf %39, %40 : vector<8x128xf32>
    %42 = arith.addf %36, %41 : vector<8x128xf32>
    %c5 = arith.constant 5 : index
    %c0_33 = arith.constant 0 : index
    %c0_34 = arith.constant 0 : index
    %43 = vector.load %arg2[%c5, %c0_33, %c0_34] : memref<12x8x32xbf16, #tpu.memory_space<vmem>>, vector<1x8x32xbf16>
    %44 = vector.shape_cast %43 : vector<1x8x32xbf16> to vector<8x32xbf16>
    %cst_35 = arith.constant dense<0.000000e+00> : vector<8x128xf32>
    %45 = tpu.matmul %44, %3, %cst_35 {dimension_numbers = #tpu.dot_dimension_numbers<[1], [0], [0], [1], [0, 0, 1, 1], [], []>} : vector<8x32xbf16>, vector<32x128xbf16>, vector<8x128xf32> -> vector<8x128xf32>
    %46 = vector.extract_strided_slice %2 {offsets = [0, 128], sizes = [8, 128], strides = [1, 1]} : vector<8x384xf32> to vector<8x128xf32>
    %47 = arith.mulf %45, %46 : vector<8x128xf32>
    %48 = arith.addf %42, %47 : vector<8x128xf32>
    %c6 = arith.constant 6 : index
    %c0_36 = arith.constant 0 : index
    %c0_37 = arith.constant 0 : index
    %49 = vector.load %arg2[%c6, %c0_36, %c0_37] : memref<12x8x32xbf16, #tpu.memory_space<vmem>>, vector<1x8x32xbf16>
    %50 = vector.shape_cast %49 : vector<1x8x32xbf16> to vector<8x32xbf16>
    %cst_38 = arith.constant dense<0.000000e+00> : vector<8x128xf32>
    %51 = tpu.matmul %50, %3, %cst_38 {dimension_numbers = #tpu.dot_dimension_numbers<[1], [0], [0], [1], [0, 0, 1, 1], [], []>} : vector<8x32xbf16>, vector<32x128xbf16>, vector<8x128xf32> -> vector<8x128xf32>
    %52 = vector.extract_strided_slice %2 {offsets = [0, 256], sizes = [8, 128], strides = [1, 1]} : vector<8x384xf32> to vector<8x128xf32>
    %53 = arith.mulf %51, %52 : vector<8x128xf32>
    %54 = arith.addf %48, %53 : vector<8x128xf32>
    %c1_39 = arith.constant 1 : index
    %c0_40 = arith.constant 0 : index
    %c0_41 = arith.constant 0 : index
    %55 = vector.load %arg6[%c1_39, %c0_40, %c0_41] : memref<3x8x128xf32, #tpu.memory_space<vmem>>, vector<1x8x128xf32>
    %56 = vector.shape_cast %55 : vector<1x8x128xf32> to vector<8x128xf32>
    %57 = vector.shape_cast %54 : vector<8x128xf32> to vector<1x8x128xf32>
    tpu.vector_store %arg6[%c1_39, %c0_40, %c0_41], %57 {strides = array<i32>} : memref<3x8x128xf32, #tpu.memory_space<vmem>>, vector<1x8x128xf32>,
    %58 = arith.truncf %54 : vector<8x128xf32> to vector<8x128xbf16>
    %cst_42 = arith.constant dense<0.000000e+00> : vector<8x128xf32>
    %59 = tpu.matmul %58, %4, %cst_42 {dimension_numbers = #tpu.dot_dimension_numbers<[1], [0], [0], [1], [0, 0, 1, 1], [], []>} : vector<8x128xbf16>, vector<128x128xbf16>, vector<8x128xf32> -> vector<8x128xf32>
    %c1_43 = arith.constant 1 : index
    %c0_44 = arith.constant 0 : index
    %c0_45 = arith.constant 0 : index
    %60 = vector.load %arg7[%c1_43, %c0_44, %c0_45] : memref<3x8x128xf32, #tpu.memory_space<vmem>>, vector<1x8x128xf32>
    %61 = vector.shape_cast %60 : vector<1x8x128xf32> to vector<8x128xf32>
    %62 = vector.shape_cast %59 : vector<8x128xf32> to vector<1x8x128xf32>
    tpu.vector_store %arg7[%c1_43, %c0_44, %c0_45], %62 {strides = array<i32>} : memref<3x8x128xf32, #tpu.memory_space<vmem>>, vector<1x8x128xf32>,
    %c11 = arith.constant 11 : index
    %c0_46 = arith.constant 0 : index
    %c0_47 = arith.constant 0 : index
    %63 = vector.load %arg2[%c11, %c0_46, %c0_47] : memref<12x8x32xbf16, #tpu.memory_space<vmem>>, vector<1x8x32xbf16>
    %64 = vector.shape_cast %63 : vector<1x8x32xbf16> to vector<8x32xbf16>
    %cst_48 = arith.constant dense<0.000000e+00> : vector<8x128xf32>
    %65 = tpu.matmul %64, %3, %cst_48 {dimension_numbers = #tpu.dot_dimension_numbers<[1], [0], [0], [1], [0, 0, 1, 1], [], []>} : vector<8x32xbf16>, vector<32x128xbf16>, vector<8x128xf32> -> vector<8x128xf32>
    %c8 = arith.constant 8 : index
    %c0_49 = arith.constant 0 : index
    %c0_50 = arith.constant 0 : index
    %66 = vector.load %arg2[%c8, %c0_49, %c0_50] : memref<12x8x32xbf16, #tpu.memory_space<vmem>>, vector<1x8x32xbf16>
    %67 = vector.shape_cast %66 : vector<1x8x32xbf16> to vector<8x32xbf16>
    %cst_51 = arith.constant dense<0.000000e+00> : vector<8x128xf32>
    %68 = tpu.matmul %67, %3, %cst_51 {dimension_numbers = #tpu.dot_dimension_numbers<[1], [0], [0], [1], [0, 0, 1, 1], [], []>} : vector<8x32xbf16>, vector<32x128xbf16>, vector<8x128xf32> -> vector<8x128xf32>
    %69 = vector.extract_strided_slice %2 {offsets = [0, 0], sizes = [8, 128], strides = [1, 1]} : vector<8x384xf32> to vector<8x128xf32>
    %70 = arith.mulf %68, %69 : vector<8x128xf32>
    %71 = arith.addf %65, %70 : vector<8x128xf32>
    %c9 = arith.constant 9 : index
    %c0_52 = arith.constant 0 : index
    %c0_53 = arith.constant 0 : index
    %72 = vector.load %arg2[%c9, %c0_52, %c0_53] : memref<12x8x32xbf16, #tpu.memory_space<vmem>>, vector<1x8x32xbf16>
    %73 = vector.shape_cast %72 : vector<1x8x32xbf16> to vector<8x32xbf16>
    %cst_54 = arith.constant dense<0.000000e+00> : vector<8x128xf32>
    %74 = tpu.matmul %73, %3, %cst_54 {dimension_numbers = #tpu.dot_dimension_numbers<[1], [0], [0], [1], [0, 0, 1, 1], [], []>} : vector<8x32xbf16>, vector<32x128xbf16>, vector<8x128xf32> -> vector<8x128xf32>
    %75 = vector.extract_strided_slice %2 {offsets = [0, 128], sizes = [8, 128], strides = [1, 1]} : vector<8x384xf32> to vector<8x128xf32>
    %76 = arith.mulf %74, %75 : vector<8x128xf32>
    %77 = arith.addf %71, %76 : vector<8x128xf32>
    %c10 = arith.constant 10 : index
    %c0_55 = arith.constant 0 : index
    %c0_56 = arith.constant 0 : index
    %78 = vector.load %arg2[%c10, %c0_55, %c0_56] : memref<12x8x32xbf16, #tpu.memory_space<vmem>>, vector<1x8x32xbf16>
    %79 = vector.shape_cast %78 : vector<1x8x32xbf16> to vector<8x32xbf16>
    %cst_57 = arith.constant dense<0.000000e+00> : vector<8x128xf32>
    %80 = tpu.matmul %79, %3, %cst_57 {dimension_numbers = #tpu.dot_dimension_numbers<[1], [0], [0], [1], [0, 0, 1, 1], [], []>} : vector<8x32xbf16>, vector<32x128xbf16>, vector<8x128xf32> -> vector<8x128xf32>
    %81 = vector.extract_strided_slice %2 {offsets = [0, 256], sizes = [8, 128], strides = [1, 1]} : vector<8x384xf32> to vector<8x128xf32>
    %82 = arith.mulf %80, %81 : vector<8x128xf32>
    %83 = arith.addf %77, %82 : vector<8x128xf32>
    %c2_58 = arith.constant 2 : index
    %c0_59 = arith.constant 0 : index
    %c0_60 = arith.constant 0 : index
    %84 = vector.load %arg6[%c2_58, %c0_59, %c0_60] : memref<3x8x128xf32, #tpu.memory_space<vmem>>, vector<1x8x128xf32>
    %85 = vector.shape_cast %84 : vector<1x8x128xf32> to vector<8x128xf32>
    %86 = vector.shape_cast %83 : vector<8x128xf32> to vector<1x8x128xf32>
    tpu.vector_store %arg6[%c2_58, %c0_59, %c0_60], %86 {strides = array<i32>} : memref<3x8x128xf32, #tpu.memory_space<vmem>>, vector<1x8x128xf32>,
    %87 = arith.truncf %83 : vector<8x128xf32> to vector<8x128xbf16>
    %cst_61 = arith.constant dense<0.000000e+00> : vector<8x128xf32>
    %88 = tpu.matmul %87, %4, %cst_61 {dimension_numbers = #tpu.dot_dimension_numbers<[1], [0], [0], [1], [0, 0, 1, 1], [], []>} : vector<8x128xbf16>, vector<128x128xbf16>, vector<8x128xf32> -> vector<8x128xf32>
    %c2_62 = arith.constant 2 : index
    %c0_63 = arith.constant 0 : index
    %c0_64 = arith.constant 0 : index
    %89 = vector.load %arg7[%c2_62, %c0_63, %c0_64] : memref<3x8x128xf32, #tpu.memory_space<vmem>>, vector<1x8x128xf32>
    %90 = vector.shape_cast %89 : vector<1x8x128xf32> to vector<8x128xf32>
    %91 = vector.shape_cast %88 : vector<8x128xf32> to vector<1x8x128xf32>
    tpu.vector_store %arg7[%c2_62, %c0_63, %c0_64], %91 {strides = array<i32>} : memref<3x8x128xf32, #tpu.memory_space<vmem>>, vector<1x8x128xf32>,
    return
  }
  func.func @transform_0(%arg0: i32) -> (i32, i32) {
    %c0_i32 = arith.constant 0 : i32
    %c0_i32_0 = arith.constant 0 : i32
    return %arg0, %c0_i32 : i32, i32
  }
  func.func @transform_1(%arg0: i32) -> (i32, i32, i32) {
    %c0_i32 = arith.constant 0 : i32
    %c0_i32_0 = arith.constant 0 : i32
    %c0_i32_1 = arith.constant 0 : i32
    return %c0_i32, %arg0, %c0_i32_0 : i32, i32, i32
  }
  func.func @transform_2(%arg0: i32) -> (i32, i32) {
    %c0_i32 = arith.constant 0 : i32
    %c0_i32_0 = arith.constant 0 : i32
    %c0_i32_1 = arith.constant 0 : i32
    return %c0_i32, %c0_i32_0 : i32, i32
  }
  func.func @transform_3(%arg0: i32) -> (i32, i32) {
    %c0_i32 = arith.constant 0 : i32
    %c0_i32_0 = arith.constant 0 : i32
    %c0_i32_1 = arith.constant 0 : i32
    return %c0_i32, %c0_i32_0 : i32, i32
  }
  func.func @transform_4(%arg0: i32) -> (i32, i32) {
    %c0_i32 = arith.constant 0 : i32
    %c0_i32_0 = arith.constant 0 : i32
    %c0_i32_1 = arith.constant 0 : i32
    return %c0_i32, %c0_i32_0 : i32, i32
  }
  func.func @transform_5(%arg0: i32) -> (i32, i32, i32) {
    %c0_i32 = arith.constant 0 : i32
    %c0_i32_0 = arith.constant 0 : i32
    %c0_i32_1 = arith.constant 0 : i32
    return %c0_i32, %arg0, %c0_i32_0 : i32, i32, i32
  }
  func.func @transform_6(%arg0: i32) -> (i32, i32, i32) {
    %c0_i32 = arith.constant 0 : i32
    %c0_i32_0 = arith.constant 0 : i32
    %c0_i32_1 = arith.constant 0 : i32
    return %c0_i32, %arg0, %c0_i32_0 : i32, i32, i32
  }
}

</mosaic_0001>

<llo_original>
// kernel: smpl_forward.1
$region0: #{smpl_forward.1}
  #allocation0 [shape = 'u32[]', space=smem, size = 0x4, offset = 0x4, fixed_abs, tag = 'smem constant byte address 0x4 - core index']
  #allocation1 [shape = 'u32[72,128]{1,0:T(1,128)}', space=vmem, size = 0x9000, scoped, tag = 'internal scratch']
  %s0 = inlined_call_operand.vmem [shape: bf16[8,224], index: 0, kind: input, shape index: {}]
  %s1 = inlined_call_operand.vmem [shape: bf16[12,8,32], index: 1, kind: input, shape index: {}]
  %s2 = inlined_call_operand.vmem [shape: bf16[224,384], index: 2, kind: input, shape index: {}]
  %s3 = inlined_call_operand.vmem [shape: bf16[32,128], index: 3, kind: input, shape index: {}]
  %s4 = inlined_call_operand.vmem [shape: bf16[128,128], index: 4, kind: input, shape index: {}]
  %s5 = inlined_call_operand.vmem [shape: f32[3,8,128], index: 5, kind: output, shape index: {0}]
  %s6 = inlined_call_operand.vmem [shape: f32[3,8,128], index: 6, kind: output, shape index: {1}]
  %7 = xla_tuple %s5, %s6
  %s8 = sld [smem:[#allocation0]]
  $region38: #{smpl_forward.1} parent=0
    _
  %s10 = ssub.s32 1, %s8
  %s11 = scalar_select 0, %s10, %s8
  // Predicated region
  $region2: #{smpl_forward.1} parent=0 // pred_check
    _
  $region3: #{smpl_forward.1} parent=0 // pred_check_branch
    %13 = sbr.rel (0) target = $region5
  $region4: #{smpl_forward.1} parent=0 // pred_region
    _
  $region5: #{smpl_forward.1} parent=0 // pred_fallthru
    _
  // Predicated region
  $region6: #{smpl_forward.1} parent=0 // pred_check
    _
  $region7: #{smpl_forward.1} parent=0 // pred_check_branch
    %15 = sbr.rel (0) target = $region9
  $region8: #{smpl_forward.1} parent=0 // pred_region
    _
  $region9: #{smpl_forward.1} parent=0 // pred_fallthru
    _
  // Predicated region
  $region10: #{smpl_forward.1} parent=0 // pred_check
    _
  $region11: #{smpl_forward.1} parent=0 // pred_check_branch
    %17 = sbr.rel (0) target = $region13
  $region12: #{smpl_forward.1} parent=0 // pred_region
    _
  $region13: #{smpl_forward.1} parent=0 // pred_fallthru
    _
  // Predicated region
  $region14: #{smpl_forward.1} parent=0 // pred_check
    _
  $region15: #{smpl_forward.1} parent=0 // pred_check_branch
    %19 = sbr.rel (0) target = $region17
  $region16: #{smpl_forward.1} parent=0 // pred_region
    _
  $region17: #{smpl_forward.1} parent=0 // pred_fallthru
    _
  // Predicated region
  $region18: #{smpl_forward.1} parent=0 // pred_check
    _
  $region19: #{smpl_forward.1} parent=0 // pred_check_branch
    %21 = sbr.rel (0) target = $region21
  $region20: #{smpl_forward.1} parent=0 // pred_region
    _
  $region21: #{smpl_forward.1} parent=0 // pred_fallthru
    _
  %v23 = vld [vmem:[%s0] sm:$0xff]
  %v24 = vld [vmem:[%s2] sm:$0xff]
  %v25 = vld [vmem:[%s2 + $0x8] sm:$0xf]
  %v26 = vld [vmem:[%s2 + $0xc] sm:$0xff]
  %v27 = vld [vmem:[%s2 + $0x14] sm:$0xf]
  %v28 = vld [vmem:[%s2 + $0x18] sm:$0xff]
  %v29 = vld [vmem:[%s2 + $0x20] sm:$0xf]
  %v30 = vld [vmem:[%s2 + $0x24] sm:$0xff]
  %v31 = vld [vmem:[%s2 + $0x2c] sm:$0xf]
  %v32 = vld [vmem:[%s2 + $0x30] sm:$0xff]
  %v33 = vld [vmem:[%s2 + $0x38] sm:$0xf]
  %v34 = vld [vmem:[%s2 + $0x3c] sm:$0xff]
  %v35 = vld [vmem:[%s2 + $0x44] sm:$0xf]
  %v36 = vld [vmem:[%s2 + $0x48] sm:$0xff]
  %v37 = vld [vmem:[%s2 + $0x50] sm:$0xf]
  %v38 = vld [vmem:[%s2 + $0x54] sm:$0xff]
  %v39 = vld [vmem:[%s2 + $0x5c] sm:$0xf]
  %v40 = vld [vmem:[%s2 + $0x60] sm:$0xff]
  %v41 = vld [vmem:[%s2 + $0x68] sm:$0xf]
  %v42 = vld [vmem:[%s2 + $0x6c] sm:$0xff]
  %v43 = vld [vmem:[%s2 + $0x74] sm:$0xf]
  %v44 = vld [vmem:[%s2 + $0x78] sm:$0xff]
  %v45 = vld [vmem:[%s2 + $0x80] sm:$0xf]
  %v46 = vld [vmem:[%s2 + $0x84] sm:$0xff]
  %v47 = vld [vmem:[%s2 + $0x8c] sm:$0xf]
  %v48 = vld [vmem:[%s2 + $0x90] sm:$0xff]
  %v49 = vld [vmem:[%s2 + $0x98] sm:$0xf]
  %v50 = vld [vmem:[%s2 + $0x9c] sm:$0xff]
  %v51 = vld [vmem:[%s2 + $0xa4] sm:$0xf]
  %v52 = vld [vmem:[%s2 + $0xa8] sm:$0xff]
  %v53 = vld [vmem:[%s2 + $0xb0] sm:$0xf]
  %v54 = vld [vmem:[%s2 + $0xb4] sm:$0xff]
  %v55 = vld [vmem:[%s2 + $0xbc] sm:$0xf]
  %v56 = vld [vmem:[%s2 + $0xc0] sm:$0xff]
  %v57 = vld [vmem:[%s2 + $0xc8] sm:$0xf]
  %v58 = vld [vmem:[%s2 + $0xcc] sm:$0xff]
  %v59 = vld [vmem:[%s2 + $0xd4] sm:$0xf]
  %v60 = vld [vmem:[%s2 + $0xd8] sm:$0xff]
  %v61 = vld [vmem:[%s2 + $0xe0] sm:$0xf]
  %v62 = vld [vmem:[%s2 + $0xe4] sm:$0xff]
  %v63 = vld [vmem:[%s2 + $0xec] sm:$0xf]
  %v64 = vld [vmem:[%s2 + $0xf0] sm:$0xff]
  %v65 = vld [vmem:[%s2 + $0xf8] sm:$0xf]
  %v66 = vld [vmem:[%s2 + $0xfc] sm:$0xff]
  %v67 = vld [vmem:[%s2 + $0x104] sm:$0xf]
  %v68 = vld [vmem:[%s2 + $0x108] sm:$0xff]
  %v69 = vld [vmem:[%s2 + $0x110] sm:$0xf]
  %v70 = vld [vmem:[%s2 + $0x114] sm:$0xff]
  %v71 = vld [vmem:[%s2 + $0x11c] sm:$0xf]
  %v72 = vld [vmem:[%s2 + $0x120] sm:$0xff]
  %v73 = vld [vmem:[%s2 + $0x128] sm:$0xf]
  %v74 = vld [vmem:[%s2 + $0x12c] sm:$0xff]
  %v75 = vld [vmem:[%s2 + $0x134] sm:$0xf]
  %v76 = vld [vmem:[%s2 + $0x138] sm:$0xff]
  %v77 = vld [vmem:[%s2 + $0x140] sm:$0xf]
  %v78 = vld [vmem:[%s2 + $0x144] sm:$0xff]
  %v79 = vld [vmem:[%s2 + $0x14c] sm:$0xf]
  %v81 = vunpack.c.l.b16 %v23
  %v82 = vunpack.c.h.b16 %v23
  %v83 = vpack.c.b16 %v81, %v81
  %v84 = vpack.c.b16 %v82, %v82
  %v142 = vunpack.c.l.b16 %v24
  %v143 = vunpack.c.h.b16 %v24
  %v144 = vunpack.c.l.b16 %v25
  %v145 = vunpack.c.l.b16 %v26
  %v146 = vunpack.c.h.b16 %v26
  %v147 = vunpack.c.l.b16 %v27
  %v148 = vunpack.c.l.b16 %v28
  %v149 = vunpack.c.h.b16 %v28
  %v150 = vunpack.c.l.b16 %v29
  %v151 = vunpack.c.l.b16 %v30
  %v152 = vunpack.c.h.b16 %v30
  %v153 = vunpack.c.l.b16 %v31
  %v154 = vunpack.c.l.b16 %v32
  %v155 = vunpack.c.h.b16 %v32
  %v156 = vunpack.c.l.b16 %v33
  %v157 = vunpack.c.l.b16 %v34
  %v158 = vunpack.c.h.b16 %v34
  %v159 = vunpack.c.l.b16 %v35
  %v160 = vunpack.c.l.b16 %v36
  %v161 = vunpack.c.h.b16 %v36
  %v162 = vunpack.c.l.b16 %v37
  %v163 = vunpack.c.l.b16 %v38
  %v164 = vunpack.c.h.b16 %v38
  %v165 = vunpack.c.l.b16 %v39
  %v166 = vunpack.c.l.b16 %v40
  %v167 = vunpack.c.h.b16 %v40
  %v168 = vunpack.c.l.b16 %v41
  %v169 = vunpack.c.l.b16 %v42
  %v170 = vunpack.c.h.b16 %v42
  %v171 = vunpack.c.l.b16 %v43
  %v172 = vunpack.c.l.b16 %v44
  %v173 = vunpack.c.h.b16 %v44
  %v174 = vunpack.c.l.b16 %v45
  %v175 = vunpack.c.l.b16 %v46
  %v176 = vunpack.c.h.b16 %v46
  %v177 = vunpack.c.l.b16 %v47
  %v178 = vunpack.c.l.b16 %v48
  %v179 = vunpack.c.h.b16 %v48
  %v180 = vunpack.c.l.b16 %v49
  %v181 = vunpack.c.l.b16 %v50
  %v182 = vunpack.c.h.b16 %v50
  %v183 = vunpack.c.l.b16 %v51
  %v184 = vunpack.c.l.b16 %v52
  %v185 = vunpack.c.h.b16 %v52
  %v186 = vunpack.c.l.b16 %v53
  %v187 = vunpack.c.l.b16 %v54
  %v188 = vunpack.c.h.b16 %v54
  %v189 = vunpack.c.l.b16 %v55
  %v190 = vunpack.c.l.b16 %v56
  %v191 = vunpack.c.h.b16 %v56
  %v192 = vunpack.c.l.b16 %v57
  %v193 = vunpack.c.l.b16 %v58
  %v194 = vunpack.c.h.b16 %v58
  %v195 = vunpack.c.l.b16 %v59
  %v196 = vunpack.c.l.b16 %v60
  %v197 = vunpack.c.h.b16 %v60
  %v198 = vunpack.c.l.b16 %v61
  %v199 = vunpack.c.l.b16 %v62
  %v200 = vunpack.c.h.b16 %v62
  %v201 = vunpack.c.l.b16 %v63
  %v202 = vunpack.c.l.b16 %v64
  %v203 = vunpack.c.h.b16 %v64
  %v204 = vunpack.c.l.b16 %v65
  %v205 = vunpack.c.l.b16 %v66
  %v206 = vunpack.c.h.b16 %v66
  %v207 = vunpack.c.l.b16 %v67
  %v208 = vunpack.c.l.b16 %v68
  %v209 = vunpack.c.h.b16 %v68
  %v210 = vunpack.c.l.b16 %v69
  %v211 = vunpack.c.l.b16 %v70
  %v212 = vunpack.c.h.b16 %v70
  %v213 = vunpack.c.l.b16 %v71
  %v214 = vunpack.c.l.b16 %v72
  %v215 = vunpack.c.h.b16 %v72
  %v216 = vunpack.c.l.b16 %v73
  %v217 = vunpack.c.l.b16 %v74
  %v218 = vunpack.c.h.b16 %v74
  %v219 = vunpack.c.l.b16 %v75
  %v220 = vunpack.c.l.b16 %v76
  %v221 = vunpack.c.h.b16 %v76
  %v222 = vunpack.c.l.b16 %v77
  %v223 = vunpack.c.l.b16 %v78
  %v224 = vunpack.c.h.b16 %v78
  %v225 = vunpack.c.l.b16 %v79
  %v226 = vpack.c.b16 %v145, %v142
  %v227 = vpack.c.b16 %v146, %v143
  %v228 = vpack.c.b16 %v147, %v144
  %v229 = vpack.c.b16 %v151, %v148
  %v230 = vpack.c.b16 %v152, %v149
  %v231 = vpack.c.b16 %v153, %v150
  %v232 = vpack.c.b16 %v157, %v154
  %v233 = vpack.c.b16 %v158, %v155
  %v234 = vpack.c.b16 %v159, %v156
  %v235 = vpack.c.b16 %v163, %v160
  %v236 = vpack.c.b16 %v164, %v161
  %v237 = vpack.c.b16 %v165, %v162
  %v238 = vpack.c.b16 %v169, %v166
  %v239 = vpack.c.b16 %v170, %v167
  %v240 = vpack.c.b16 %v171, %v168
  %v241 = vpack.c.b16 %v175, %v172
  %v242 = vpack.c.b16 %v176, %v173
  %v243 = vpack.c.b16 %v177, %v174
  %v244 = vpack.c.b16 %v181, %v178
  %v245 = vpack.c.b16 %v182, %v179
  %v246 = vpack.c.b16 %v183, %v180
  %v247 = vpack.c.b16 %v187, %v184
  %v248 = vpack.c.b16 %v188, %v185
  %v249 = vpack.c.b16 %v189, %v186
  %v250 = vpack.c.b16 %v193, %v190
  %v251 = vpack.c.b16 %v194, %v191
  %v252 = vpack.c.b16 %v195, %v192
  %v253 = vpack.c.b16 %v199, %v196
  %v254 = vpack.c.b16 %v200, %v197
  %v255 = vpack.c.b16 %v201, %v198
  %v256 = vpack.c.b16 %v205, %v202
  %v257 = vpack.c.b16 %v206, %v203
  %v258 = vpack.c.b16 %v207, %v204
  %v259 = vpack.c.b16 %v211, %v208
  %v260 = vpack.c.b16 %v212, %v209
  %v261 = vpack.c.b16 %v213, %v210
  %v262 = vpack.c.b16 %v217, %v214
  %v263 = vpack.c.b16 %v218, %v215
  %v264 = vpack.c.b16 %v219, %v216
  %v265 = vpack.c.b16 %v223, %v220
  %v266 = vpack.c.b16 %v224, %v221
  %v267 = vpack.c.b16 %v225, %v222
  %vm310 = vcmask 785408
  %v312 = vsel %vm310, %v84, 0
  %314 = vmatpush.bf16.msra.mxu0 %v247
  %315 = vmatpush.bf16.msra.mxu0 %v244
  %316 = vmatpush.bf16.msra.mxu0 %v241
  %317 = vmatpush.bf16.msra.mxu0 %v238
  %318 = vmatpush.bf16.msra.mxu0 %v235
  %319 = vmatpush.bf16.msra.mxu0 %v232
  %320 = vmatpush.bf16.msra.mxu0 %v229
  %321 = vmatpush.bf16.msra.mxu0 %v226
  %322 = vmatmul.bf16.gmra.mxu0 %v83
  %v323 = vpop.f32.mrf.mxu0
  %v324 = vadd.f32 0.0, %v323
  %v325 = vpop.f32.mrf.mxu0
  %326 = vdwg.mxu0
  %327 = vmatpush.bf16.msra.mxu0 0
  %328 = vmatpush.bf16.msra.mxu0 0
  %329 = vmatpush.bf16.msra.mxu0 %v265
  %330 = vmatpush.bf16.msra.mxu0 %v262
  %331 = vmatpush.bf16.msra.mxu0 %v259
  %332 = vmatpush.bf16.msra.mxu0 %v256
  %333 = vmatpush.bf16.msra.mxu0 %v253
  %334 = vmatpush.bf16.msra.mxu0 %v250
  %335 = vmatmul.bf16.gmra.mxu0 %v312
  %v336 = vpop.f32.mrf.mxu0
  %v337 = vadd.f32 %v324, %v336
  %v338 = vpop.f32.mrf.mxu0
  %339 = vdwg.mxu0
  %340 = vmatpush.bf16.msra.mxu0 %v248
  %341 = vmatpush.bf16.msra.mxu0 %v245
  %342 = vmatpush.bf16.msra.mxu0 %v242
  %343 = vmatpush.bf16.msra.mxu0 %v239
  %344 = vmatpush.bf16.msra.mxu0 %v236
  %345 = vmatpush.bf16.msra.mxu0 %v233
  %346 = vmatpush.bf16.msra.mxu0 %v230
  %347 = vmatpush.bf16.msra.mxu0 %v227
  %348 = vmatmul.bf16.gmra.mxu0 %v83
  %v349 = vpop.f32.mrf.mxu0
  %v350 = vadd.f32 0.0, %v349
  %v351 = vpop.f32.mrf.mxu0
  %352 = vdwg.mxu0
  %353 = vmatpush.bf16.msra.mxu0 0
  %354 = vmatpush.bf16.msra.mxu0 0
  %355 = vmatpush.bf16.msra.mxu0 %v266
  %356 = vmatpush.bf16.msra.mxu0 %v263
  %357 = vmatpush.bf16.msra.mxu0 %v260
  %358 = vmatpush.bf16.msra.mxu0 %v257
  %359 = vmatpush.bf16.msra.mxu0 %v254
  %360 = vmatpush.bf16.msra.mxu0 %v251
  %361 = vmatmul.bf16.gmra.mxu0 %v312
  %v362 = vpop.f32.mrf.mxu0
  %v363 = vadd.f32 %v350, %v362
  %v364 = vpop.f32.mrf.mxu0
  %365 = vdwg.mxu0
  %366 = vmatpush.bf16.msra.mxu0 %v249
  %367 = vmatpush.bf16.msra.mxu0 %v246
  %368 = vmatpush.bf16.msra.mxu0 %v243
  %369 = vmatpush.bf16.msra.mxu0 %v240
  %370 = vmatpush.bf16.msra.mxu0 %v237
  %371 = vmatpush.bf16.msra.mxu0 %v234
  %372 = vmatpush.bf16.msra.mxu0 %v231
  %373 = vmatpush.bf16.msra.mxu0 %v228
  %374 = vmatmul.bf16.gmra.mxu0 %v83
  %v375 = vpop.f32.mrf.mxu0
  %v376 = vadd.f32 0.0, %v375
  %v377 = vpop.f32.mrf.mxu0
  %378 = vdwg.mxu0
  %379 = vmatpush.bf16.msra.mxu0 0
  %380 = vmatpush.bf16.msra.mxu0 0
  %381 = vmatpush.bf16.msra.mxu0 %v267
  %382 = vmatpush.bf16.msra.mxu0 %v264
  %383 = vmatpush.bf16.msra.mxu0 %v261
  %384 = vmatpush.bf16.msra.mxu0 %v258
  %385 = vmatpush.bf16.msra.mxu0 %v255
  %386 = vmatpush.bf16.msra.mxu0 %v252
  %387 = vmatmul.bf16.gmra.mxu0 %v312
  %v388 = vpop.f32.mrf.mxu0
  %v389 = vadd.f32 %v376, %v388
  %v390 = vpop.f32.mrf.mxu0
  %391 = vdwg.mxu0
  %v392 = vld [vmem:[%s3] sm:$0xf]
  %v393 = vld [vmem:[%s3 + $0x4] sm:$0xf]
  %v394 = vld [vmem:[%s3 + $0x8] sm:$0xf]
  %v395 = vld [vmem:[%s3 + $0xc] sm:$0xf]
  %v396 = vld [vmem:[%s4] sm:$0xf]
  %v397 = vld [vmem:[%s4 + $0x4] sm:$0xf]
  %v398 = vld [vmem:[%s4 + $0x8] sm:$0xf]
  %v399 = vld [vmem:[%s4 + $0xc] sm:$0xf]
  %v400 = vld [vmem:[%s4 + $0x10] sm:$0xf]
  %v401 = vld [vmem:[%s4 + $0x14] sm:$0xf]
  %v402 = vld [vmem:[%s4 + $0x18] sm:$0xf]
  %v403 = vld [vmem:[%s4 + $0x1c] sm:$0xf]
  %v404 = vld [vmem:[%s4 + $0x20] sm:$0xf]
  %v405 = vld [vmem:[%s4 + $0x24] sm:$0xf]
  %v406 = vld [vmem:[%s4 + $0x28] sm:$0xf]
  %v407 = vld [vmem:[%s4 + $0x2c] sm:$0xf]
  %v408 = vld [vmem:[%s4 + $0x30] sm:$0xf]
  %v409 = vld [vmem:[%s4 + $0x34] sm:$0xf]
  %v410 = vld [vmem:[%s4 + $0x38] sm:$0xf]
  %v411 = vld [vmem:[%s4 + $0x3c] sm:$0xf]
  %s412 = scalar_lea.vmem %s1, 12
  %v413 = vld [vmem:[%s412] sm:$0xf]
  %v414 = vld [vmem:[%s1] sm:$0xf]
  %v419 = vunpack.c.l.b16 %v392
  %v420 = vunpack.c.l.b16 %v393
  %v421 = vunpack.c.l.b16 %v394
  %v422 = vunpack.c.l.b16 %v395
  %v423 = vpack.c.b16 %v420, %v419
  %v424 = vpack.c.b16 %v422, %v421
  %vm427 = vcmask 261120
  %v429 = vsel %vm427, %v414, 0
  %431 = vmatpush.bf16.msra.mxu0 0
  %432 = vmatpush.bf16.msra.mxu0 0
  %433 = vmatpush.bf16.msra.mxu0 0
  %434 = vmatpush.bf16.msra.mxu0 0
  %435 = vmatpush.bf16.msra.mxu0 0
  %436 = vmatpush.bf16.msra.mxu0 0
  %437 = vmatpush.bf16.msra.mxu0 %v424
  %438 = vmatpush.bf16.msra.mxu0 %v423
  %439 = vmatmul.bf16.gmra.mxu0 %v429
  %v440 = vpop.f32.mrf.mxu0
  %v441 = vadd.f32 0.0, %v440
  %v442 = vpop.f32.mrf.mxu0
  %443 = vdwg.mxu0
  %v444 = vmul.f32 %v441, %v337
  %v446 = vsel %vm427, %v413, 0
  %448 = vmatpush.bf16.msra.mxu0 0
  %449 = vmatpush.bf16.msra.mxu0 0
  %450 = vmatpush.bf16.msra.mxu0 0
  %451 = vmatpush.bf16.msra.mxu0 0
  %452 = vmatpush.bf16.msra.mxu0 0
  %453 = vmatpush.bf16.msra.mxu0 0
  %454 = vmatpush.bf16.msra.mxu0 %v424
  %455 = vmatpush.bf16.msra.mxu0 %v423
  %456 = vmatmul.bf16.gmra.mxu0 %v446
  %v457 = vpop.f32.mrf.mxu0
  %v458 = vadd.f32 %v444, %v457
  %v459 = vpop.f32.mrf.mxu0
  %460 = vdwg.mxu0
  %s461 = scalar_lea.vmem %s1, 4
  %v462 = vld [vmem:[%s461] sm:$0xf]
  %v464 = vsel %vm427, %v462, 0
  %466 = vmatpush.bf16.msra.mxu0 0
  %467 = vmatpush.bf16.msra.mxu0 0
  %468 = vmatpush.bf16.msra.mxu0 0
  %469 = vmatpush.bf16.msra.mxu0 0
  %470 = vmatpush.bf16.msra.mxu0 0
  %471 = vmatpush.bf16.msra.mxu0 0
  %472 = vmatpush.bf16.msra.mxu0 %v424
  %473 = vmatpush.bf16.msra.mxu0 %v423
  %474 = vmatmul.bf16.gmra.mxu0 %v464
  %v475 = vpop.f32.mrf.mxu0
  %v476 = vadd.f32 0.0, %v475
  %v477 = vpop.f32.mrf.mxu0
  %478 = vdwg.mxu0
  %v479 = vmul.f32 %v476, %v363
  %v480 = vadd.f32 %v458, %v479
  %s481 = scalar_lea.vmem %s1, 8
  %v482 = vld [vmem:[%s481] sm:$0xf]
  %v484 = vsel %vm427, %v482, 0
  %486 = vmatpush.bf16.msra.mxu0 0
  %487 = vmatpush.bf16.msra.mxu0 0
  %488 = vmatpush.bf16.msra.mxu0 0
  %489 = vmatpush.bf16.msra.mxu0 0
  %490 = vmatpush.bf16.msra.mxu0 0
  %491 = vmatpush.bf16.msra.mxu0 0
  %492 = vmatpush.bf16.msra.mxu0 %v424
  %493 = vmatpush.bf16.msra.mxu0 %v423
  %494 = vmatmul.bf16.gmra.mxu0 %v484
  %v495 = vpop.f32.mrf.mxu0
  %v496 = vadd.f32 0.0, %v495
  %v497 = vpop.f32.mrf.mxu0
  %498 = vdwg.mxu0
  %v499 = vmul.f32 %v496, %v389
  %v500 = vadd.f32 %v480, %v499
  %501 = vst [vmem:[%s5] sm:$0xff] %v500
  %v502 = vpack.c.bf16 %v500, %v500
  %v519 = vunpack.c.l.b16 %v396
  %v520 = vunpack.c.l.b16 %v397
  %v521 = vunpack.c.l.b16 %v398
  %v522 = vunpack.c.l.b16 %v399
  %v523 = vunpack.c.l.b16 %v400
  %v524 = vunpack.c.l.b16 %v401
  %v525 = vunpack.c.l.b16 %v402
  %v526 = vunpack.c.l.b16 %v403
  %v527 = vunpack.c.l.b16 %v404
  %v528 = vunpack.c.l.b16 %v405
  %v529 = vunpack.c.l.b16 %v406
  %v530 = vunpack.c.l.b16 %v407
  %v531 = vunpack.c.l.b16 %v408
  %v532 = vunpack.c.l.b16 %v409
  %v533 = vunpack.c.l.b16 %v410
  %v534 = vunpack.c.l.b16 %v411
  %v535 = vpack.c.b16 %v520, %v519
  %v536 = vpack.c.b16 %v522, %v521
  %v537 = vpack.c.b16 %v524, %v523
  %v538 = vpack.c.b16 %v526, %v525
  %v539 = vpack.c.b16 %v528, %v527
  %v540 = vpack.c.b16 %v530, %v529
  %v541 = vpack.c.b16 %v532, %v531
  %v542 = vpack.c.b16 %v534, %v533
  %551 = vmatpush.bf16.msra.mxu0 %v542
  %552 = vmatpush.bf16.msra.mxu0 %v541
  %553 = vmatpush.bf16.msra.mxu0 %v540
  %554 = vmatpush.bf16.msra.mxu0 %v539
  %555 = vmatpush.bf16.msra.mxu0 %v538
  %556 = vmatpush.bf16.msra.mxu0 %v537
  %557 = vmatpush.bf16.msra.mxu0 %v536
  %558 = vmatpush.bf16.msra.mxu0 %v535
  %559 = vmatmul.bf16.gmra.mxu0 %v502
  %v560 = vpop.f32.mrf.mxu0
  %v561 = vadd.f32 0.0, %v560
  %v562 = vpop.f32.mrf.mxu0
  %563 = vdwg.mxu0
  %564 = vst [vmem:[%s6] sm:$0xff] %v561
  %s565 = scalar_lea.vmem %s1, 28
  %v566 = vld [vmem:[%s565] sm:$0xf]
  %s567 = scalar_lea.vmem %s1, 16
  %v568 = vld [vmem:[%s567] sm:$0xf]
  %v570 = vsel %vm427, %v568, 0
  %572 = vmatpush.bf16.msra.mxu0 0
  %573 = vmatpush.bf16.msra.mxu0 0
  %574 = vmatpush.bf16.msra.mxu0 0
  %575 = vmatpush.bf16.msra.mxu0 0
  %576 = vmatpush.bf16.msra.mxu0 0
  %577 = vmatpush.bf16.msra.mxu0 0
  %578 = vmatpush.bf16.msra.mxu0 %v424
  %579 = vmatpush.bf16.msra.mxu0 %v423
  %580 = vmatmul.bf16.gmra.mxu0 %v570
  %v581 = vpop.f32.mrf.mxu0
  %v582 = vadd.f32 0.0, %v581
  %v583 = vpop.f32.mrf.mxu0
  %584 = vdwg.mxu0
  %v585 = vmul.f32 %v582, %v337
  %v587 = vsel %vm427, %v566, 0
  %589 = vmatpush.bf16.msra.mxu0 0
  %590 = vmatpush.bf16.msra.mxu0 0
  %591 = vmatpush.bf16.msra.mxu0 0
  %592 = vmatpush.bf16.msra.mxu0 0
  %593 = vmatpush.bf16.msra.mxu0 0
  %594 = vmatpush.bf16.msra.mxu0 0
  %595 = vmatpush.bf16.msra.mxu0 %v424
  %596 = vmatpush.bf16.msra.mxu0 %v423
  %597 = vmatmul.bf16.gmra.mxu0 %v587
  %v598 = vpop.f32.mrf.mxu0
  %v599 = vadd.f32 %v585, %v598
  %v600 = vpop.f32.mrf.mxu0
  %601 = vdwg.mxu0
  %s602 = scalar_lea.vmem %s1, 20
  %v603 = vld [vmem:[%s602] sm:$0xf]
  %v605 = vsel %vm427, %v603, 0
  %607 = vmatpush.bf16.msra.mxu0 0
  %608 = vmatpush.bf16.msra.mxu0 0
  %609 = vmatpush.bf16.msra.mxu0 0
  %610 = vmatpush.bf16.msra.mxu0 0
  %611 = vmatpush.bf16.msra.mxu0 0
  %612 = vmatpush.bf16.msra.mxu0 0
  %613 = vmatpush.bf16.msra.mxu0 %v424
  %614 = vmatpush.bf16.msra.mxu0 %v423
  %615 = vmatmul.bf16.gmra.mxu0 %v605
  %v616 = vpop.f32.mrf.mxu0
  %v617 = vadd.f32 0.0, %v616
  %v618 = vpop.f32.mrf.mxu0
  %619 = vdwg.mxu0
  %v620 = vmul.f32 %v617, %v363
  %v621 = vadd.f32 %v599, %v620
  %s622 = scalar_lea.vmem %s1, 24
  %v623 = vld [vmem:[%s622] sm:$0xf]
  %v625 = vsel %vm427, %v623, 0
  %627 = vmatpush.bf16.msra.mxu0 0
  %628 = vmatpush.bf16.msra.mxu0 0
  %629 = vmatpush.bf16.msra.mxu0 0
  %630 = vmatpush.bf16.msra.mxu0 0
  %631 = vmatpush.bf16.msra.mxu0 0
  %632 = vmatpush.bf16.msra.mxu0 0
  %633 = vmatpush.bf16.msra.mxu0 %v424
  %634 = vmatpush.bf16.msra.mxu0 %v423
  %635 = vmatmul.bf16.gmra.mxu0 %v625
  %v636 = vpop.f32.mrf.mxu0
  %v637 = vadd.f32 0.0, %v636
  %v638 = vpop.f32.mrf.mxu0
  %639 = vdwg.mxu0
  %v640 = vmul.f32 %v637, %v389
  %v641 = vadd.f32 %v621, %v640
  %s642 = scalar_lea.vmem %s5, 8
  %643 = vst [vmem:[%s642] sm:$0xff] %v641
  %v644 = vpack.c.bf16 %v641, %v641
  %645 = vmatpush.bf16.msra.mxu0 %v542
  %646 = vmatpush.bf16.msra.mxu0 %v541
  %647 = vmatpush.bf16.msra.mxu0 %v540
  %648 = vmatpush.bf16.msra.mxu0 %v539
  %649 = vmatpush.bf16.msra.mxu0 %v538
  %650 = vmatpush.bf16.msra.mxu0 %v537
  %651 = vmatpush.bf16.msra.mxu0 %v536
  %652 = vmatpush.bf16.msra.mxu0 %v535
  %653 = vmatmul.bf16.gmra.mxu0 %v644
  %v654 = vpop.f32.mrf.mxu0
  %v655 = vadd.f32 0.0, %v654
  %v656 = vpop.f32.mrf.mxu0
  %657 = vdwg.mxu0
  %s658 = scalar_lea.vmem %s6, 8
  %659 = vst [vmem:[%s658] sm:$0xff] %v655
  %s660 = scalar_lea.vmem %s1, 44
  %v661 = vld [vmem:[%s660] sm:$0xf]
  %s662 = scalar_lea.vmem %s1, 32
  %v663 = vld [vmem:[%s662] sm:$0xf]
  %v665 = vsel %vm427, %v663, 0
  %667 = vmatpush.bf16.msra.mxu0 0
  %668 = vmatpush.bf16.msra.mxu0 0
  %669 = vmatpush.bf16.msra.mxu0 0
  %670 = vmatpush.bf16.msra.mxu0 0
  %671 = vmatpush.bf16.msra.mxu0 0
  %672 = vmatpush.bf16.msra.mxu0 0
  %673 = vmatpush.bf16.msra.mxu0 %v424
  %674 = vmatpush.bf16.msra.mxu0 %v423
  %675 = vmatmul.bf16.gmra.mxu0 %v665
  %v676 = vpop.f32.mrf.mxu0
  %v677 = vadd.f32 0.0, %v676
  %v678 = vpop.f32.mrf.mxu0
  %679 = vdwg.mxu0
  %v680 = vmul.f32 %v677, %v337
  %v682 = vsel %vm427, %v661, 0
  %684 = vmatpush.bf16.msra.mxu0 0
  %685 = vmatpush.bf16.msra.mxu0 0
  %686 = vmatpush.bf16.msra.mxu0 0
  %687 = vmatpush.bf16.msra.mxu0 0
  %688 = vmatpush.bf16.msra.mxu0 0
  %689 = vmatpush.bf16.msra.mxu0 0
  %690 = vmatpush.bf16.msra.mxu0 %v424
  %691 = vmatpush.bf16.msra.mxu0 %v423
  %692 = vmatmul.bf16.gmra.mxu0 %v682
  %v693 = vpop.f32.mrf.mxu0
  %v694 = vadd.f32 %v680, %v693
  %v695 = vpop.f32.mrf.mxu0
  %696 = vdwg.mxu0
  %s697 = scalar_lea.vmem %s1, 36
  %v698 = vld [vmem:[%s697] sm:$0xf]
  %v700 = vsel %vm427, %v698, 0
  %702 = vmatpush.bf16.msra.mxu0 0
  %703 = vmatpush.bf16.msra.mxu0 0
  %704 = vmatpush.bf16.msra.mxu0 0
  %705 = vmatpush.bf16.msra.mxu0 0
  %706 = vmatpush.bf16.msra.mxu0 0
  %707 = vmatpush.bf16.msra.mxu0 0
  %708 = vmatpush.bf16.msra.mxu0 %v424
  %709 = vmatpush.bf16.msra.mxu0 %v423
  %710 = vmatmul.bf16.gmra.mxu0 %v700
  %v711 = vpop.f32.mrf.mxu0
  %v712 = vadd.f32 0.0, %v711
  %v713 = vpop.f32.mrf.mxu0
  %714 = vdwg.mxu0
  %v715 = vmul.f32 %v712, %v363
  %v716 = vadd.f32 %v694, %v715
  %s717 = scalar_lea.vmem %s1, 40
  %v718 = vld [vmem:[%s717] sm:$0xf]
  %v720 = vsel %vm427, %v718, 0
  %722 = vmatpush.bf16.msra.mxu0 0
  %723 = vmatpush.bf16.msra.mxu0 0
  %724 = vmatpush.bf16.msra.mxu0 0
  %725 = vmatpush.bf16.msra.mxu0 0
  %726 = vmatpush.bf16.msra.mxu0 0
  %727 = vmatpush.bf16.msra.mxu0 0
  %728 = vmatpush.bf16.msra.mxu0 %v424
  %729 = vmatpush.bf16.msra.mxu0 %v423
  %730 = vmatmul.bf16.gmra.mxu0 %v720
  %v731 = vpop.f32.mrf.mxu0
  %v732 = vadd.f32 0.0, %v731
  %v733 = vpop.f32.mrf.mxu0
  %734 = vdwg.mxu0
  %v735 = vmul.f32 %v732, %v389
  %v736 = vadd.f32 %v716, %v735
  %s737 = scalar_lea.vmem %s5, 16
  %738 = vst [vmem:[%s737] sm:$0xff] %v736
  %v739 = vpack.c.bf16 %v736, %v736
  %740 = vmatpush.bf16.msra.mxu0 %v542
  %741 = vmatpush.bf16.msra.mxu0 %v541
  %742 = vmatpush.bf16.msra.mxu0 %v540
  %743 = vmatpush.bf16.msra.mxu0 %v539
  %744 = vmatpush.bf16.msra.mxu0 %v538
  %745 = vmatpush.bf16.msra.mxu0 %v537
  %746 = vmatpush.bf16.msra.mxu0 %v536
  %747 = vmatpush.bf16.msra.mxu0 %v535
  %748 = vmatmul.bf16.gmra.mxu0 %v739
  %v749 = vpop.f32.mrf.mxu0
  %v750 = vadd.f32 0.0, %v749
  %v751 = vpop.f32.mrf.mxu0
  %752 = vdwg.mxu0
  %s753 = scalar_lea.vmem %s6, 16
  %754 = vst [vmem:[%s753] sm:$0xff] %v750
  // Predicated region
  $region22: #{smpl_forward.1} parent=0 // pred_check
    _
  $region23: #{smpl_forward.1} parent=0 // pred_check_branch
    %756 = sbr.rel (0) target = $region25
  $region24: #{smpl_forward.1} parent=0 // pred_region
    _
  $region25: #{smpl_forward.1} parent=0 // pred_fallthru
    _
  // Predicated region
  $region26: #{smpl_forward.1} parent=0 // pred_check
    _
  $region27: #{smpl_forward.1} parent=0 // pred_check_branch
    %758 = sbr.rel (0) target = $region29
  $region28: #{smpl_forward.1} parent=0 // pred_region
    _
  $region29: #{smpl_forward.1} parent=0 // pred_fallthru
    _
  // Predicated region
  $region30: #{smpl_forward.1} parent=0 // pred_check
    _
  $region31: #{smpl_forward.1} parent=0 // pred_check_branch
    %760 = sbr.rel (0) target = $region33
  $region32: #{smpl_forward.1} parent=0 // pred_region
    _
  $region33: #{smpl_forward.1} parent=0 // pred_fallthru
    _
  // Predicated region
  $region34: #{smpl_forward.1} parent=0 // pred_check
    _
  $region35: #{smpl_forward.1} parent=0 // pred_check_branch
    %762 = sbr.rel (0) target = $region37
  $region36: #{smpl_forward.1} parent=0 // pred_region
    _
  $region37: #{smpl_forward.1} parent=0 // pred_fallthru
    _

</llo_original>
